<compile_context>
chip_gen: v6e
topology: v6e:2x2x1
jax: 0.10.0
libtpu: 0.0.40
codegen_flags: <defaults>
</compile_context>

<pallas_src>
import functools

import jax
import jax.numpy as jnp
import numpy as np
from jax.experimental import pallas as pl
from jax.experimental.pallas import tpu as pltpu  # noqa: F401  (kept for future CORE_PARALLEL / vmem_limit use)


def embed_kernel(x_ref, scale_ref, w_ref, bias_ref, o_ref, *, bs, C, D1):
    # x_ref:     (bs*C, JT)   NCHW input slab, all batch elements stacked on sublanes
    # scale_ref: (bs*C, JT)   folded BN scale, tiled over the batch
    # w_ref:     (D1, C)      1x1-conv weight
    # bias_ref:  (D1, JT)     W @ folded-BN-shift, precomputed in the wrapper
    # o_ref:     (bs*D1, JT)  lane-dense output slab (NCHW order)
    xn = x_ref[...] * scale_ref[...]          # folded BatchNorm (shift folded into bias)
    w = w_ref[...]
    bias = bias_ref[...]
    # bs is tiny (2): static unrolled loop, one MXU dot per batch element,
    # both scheduled within a single kernel invocation.
    for b in range(bs):
        y = jnp.dot(w, xn[b * C:(b + 1) * C, :],
                    preferred_element_type=jnp.float32) + bias   # 1x1 conv + folded shift
        o_ref[b * D1:(b + 1) * D1, :] = jnp.maximum(y, 0.0).astype(o_ref.dtype)  # ReLU


def embed_forward(x_nchw, bn_gamma, bn_beta, bn_mean, bn_var, conv_w, eps=1e-5):
    """x_nchw: (bs, C, J, T) float32. conv_w: (D1, C, 1, 1). Returns (bs, D1, J, T)."""
    bs, C, J, T = x_nchw.shape
    D1 = conv_w.shape[0]
    JT = J * T

    # Fold eval-mode BatchNorm1d(C*J) into per-(c, j) scale & shift.
    # Channel index in the BN view (bs, C*J, T) is c*J + j.
    inv_std = 1.0 / jnp.sqrt(bn_var + eps)
    scale_cj = (bn_gamma * inv_std).reshape(C, J)                       # (C, J)
    shift_cj = (bn_beta - bn_mean * bn_gamma * inv_std).reshape(C, J)   # (C, J)

    # Broadcast over T and flatten (J, T) -> J*T so it lines up with the NCHW slab.
    scale_b = jnp.broadcast_to(scale_cj[:, :, None], (C, J, T)).reshape(C, JT)
    shift_b = jnp.broadcast_to(shift_cj[:, :, None], (C, J, T)).reshape(C, JT)

    w = conv_w.reshape(D1, C)                                           # (D1, C)
    # Fold the BN shift through the linear 1x1 conv:  W @ (x*s + t) = W@(x*s) + W@t
    bias = w @ shift_b                                                  # (D1, JT)

    # Tile scale across the batch so the elementwise BN runs on a full-sublane
    # (bs*C, JT) = (8, 200) slab.  All reshapes below are contiguous (free).
    scale_tiled = jnp.broadcast_to(scale_b[None], (bs, C, JT)).reshape(bs * C, JT)
    x2 = x_nchw.reshape(bs * C, JT)                                     # NCHW, merged trailing dims

    kernel = functools.partial(embed_kernel, bs=bs, C=C, D1=D1)
    out = pl.pallas_call(
        kernel,
        out_shape=jax.ShapeDtypeStruct((bs * D1, JT), x_nchw.dtype),
        # No grid / BlockSpecs: single invocation, whole arrays resident in VMEM
        # (total ~45 KB -- far below any generation's scoped VMEM limit).
    )(x2, scale_tiled, w, bias)

    return out.reshape(bs, D1, J, T)    # NCHW output, free reshape


def embed_reference(x_nchw, bn_gamma, bn_beta, bn_mean, bn_var, conv_w, eps=1e-5):
    """Pure-JAX reference mirroring the PyTorch forward (eval-mode BN)."""
    bs, C, J, T = x_nchw.shape
    D1 = conv_w.shape[0]
    xv = x_nchw.reshape(bs, C * J, T)
    xv = (xv - bn_mean[None, :, None]) / jnp.sqrt(bn_var[None, :, None] + eps)
    xv = xv * bn_gamma[None, :, None] + bn_beta[None, :, None]
    xn = xv.reshape(bs, C, J, T)
    w = conv_w.reshape(D1, C)
    y = jnp.einsum("bcjt,oc->bojt", xn, w)
    return jnp.maximum(y, 0.0)


if __name__ == "__main__":
    bs, C, J, T = 2, 4, 25, 8      # dim=4, num_joints=25 (fixed by norm_data), step=8
    D1 = 8                         # dim1=8

    key = jax.random.PRNGKey(0)
    kx, kg, kb, km, kv, kw = jax.random.split(key, 6)

    x = jax.random.normal(kx, (bs, C, J, T), dtype=jnp.float32)

    # BatchNorm1d(C*J) parameters / running stats (deterministic, non-trivial).
    bn_gamma = 1.0 + 0.1 * jax.random.normal(kg, (C * J,), dtype=jnp.float32)
    bn_beta = 0.1 * jax.random.normal(kb, (C * J,), dtype=jnp.float32)
    bn_mean = 0.1 * jax.random.normal(km, (C * J,), dtype=jnp.float32)
    bn_var = jax.random.uniform(kv, (C * J,), dtype=jnp.float32,
                                minval=0.5, maxval=1.5)

    # Conv2d(C, D1, kernel_size=1, bias=False) weight, kaiming-uniform-ish init.
    bound = 1.0 / np.sqrt(C)
    conv_w = jax.random.uniform(kw, (D1, C, 1, 1), dtype=jnp.float32,
                                minval=-bound, maxval=bound)

    out = embed_forward(x, bn_gamma, bn_beta, bn_mean, bn_var, conv_w)
    out = jax.block_until_ready(out)

    ref = embed_reference(x, bn_gamma, bn_beta, bn_mean, bn_var, conv_w)
    np.testing.assert_allclose(np.asarray(out), np.asarray(ref),
                               rtol=1e-5, atol=1e-5)
    assert out.shape == (bs, D1, J, T)
    print("KERNEL_OK")
</pallas_src>

<mosaic_0001>
module attributes {stable_mosaic.version = 11 : i64} {
  func.func @embed_kernel(%arg0: memref<8x200xf32, #tpu.memory_space<vmem>>, %arg1: memref<8x200xf32, #tpu.memory_space<vmem>>, %arg2: memref<8x4xf32, #tpu.memory_space<vmem>>, %arg3: memref<8x200xf32, #tpu.memory_space<vmem>>, %arg4: memref<16x200xf32, #tpu.memory_space<vmem>>) attributes {dimension_semantics = [], scalar_prefetch = 0 : i64, scratch_operands = 0 : i64, tpu.core_type = #tpu.core_type<tc>} {
    %c0 = arith.constant 0 : index
    %c0_0 = arith.constant 0 : index
    %0 = vector.load %arg0[%c0, %c0_0] : memref<8x200xf32, #tpu.memory_space<vmem>>, vector<8x200xf32>
    %c0_1 = arith.constant 0 : index
    %c0_2 = arith.constant 0 : index
    %1 = vector.load %arg1[%c0_1, %c0_2] : memref<8x200xf32, #tpu.memory_space<vmem>>, vector<8x200xf32>
    %2 = arith.mulf %0, %1 : vector<8x200xf32>
    %c0_3 = arith.constant 0 : index
    %c0_4 = arith.constant 0 : index
    %3 = vector.load %arg2[%c0_3, %c0_4] : memref<8x4xf32, #tpu.memory_space<vmem>>, vector<8x4xf32>
    %c0_5 = arith.constant 0 : index
    %c0_6 = arith.constant 0 : index
    %4 = vector.load %arg3[%c0_5, %c0_6] : memref<8x200xf32, #tpu.memory_space<vmem>>, vector<8x200xf32>
    %5 = vector.extract_strided_slice %2 {offsets = [0, 0], sizes = [4, 200], strides = [1, 1]} : vector<8x200xf32> to vector<4x200xf32>
    %cst = arith.constant dense<0.000000e+00> : vector<8x200xf32>
    %6 = tpu.matmul %3, %5, %cst {dimension_numbers = #tpu.dot_dimension_numbers<[1], [0], [0], [1], [0, 0, 1, 1], [], []>} : vector<8x4xf32>, vector<4x200xf32>, vector<8x200xf32> -> vector<8x200xf32>
    %7 = arith.addf %6, %4 : vector<8x200xf32>
    %cst_7 = arith.constant 0.000000e+00 : f32
    %8 = vector.broadcast %cst_7 : f32 to vector<8x200xf32>
    %9 = arith.maximumf %7, %8 : vector<8x200xf32>
    %c0_8 = arith.constant 0 : index
    %c0_9 = arith.constant 0 : index
    %10 = vector.load %arg4[%c0_8, %c0_9] : memref<16x200xf32, #tpu.memory_space<vmem>>, vector<8x200xf32>
    tpu.vector_store %arg4[%c0_8, %c0_9], %9 {strides = array<i32>} : memref<16x200xf32, #tpu.memory_space<vmem>>, vector<8x200xf32>,
    %11 = vector.extract_strided_slice %2 {offsets = [4, 0], sizes = [4, 200], strides = [1, 1]} : vector<8x200xf32> to vector<4x200xf32>
    %cst_10 = arith.constant dense<0.000000e+00> : vector<8x200xf32>
    %12 = tpu.matmul %3, %11, %cst_10 {dimension_numbers = #tpu.dot_dimension_numbers<[1], [0], [0], [1], [0, 0, 1, 1], [], []>} : vector<8x4xf32>, vector<4x200xf32>, vector<8x200xf32> -> vector<8x200xf32>
    %13 = arith.addf %12, %4 : vector<8x200xf32>
    %cst_11 = arith.constant 0.000000e+00 : f32
    %14 = vector.broadcast %cst_11 : f32 to vector<8x200xf32>
    %15 = arith.maximumf %13, %14 : vector<8x200xf32>
    %c8 = arith.constant 8 : index
    %c0_12 = arith.constant 0 : index
    %16 = vector.load %arg4[%c8, %c0_12] : memref<16x200xf32, #tpu.memory_space<vmem>>, vector<8x200xf32>
    tpu.vector_store %arg4[%c8, %c0_12], %15 {strides = array<i32>} : memref<16x200xf32, #tpu.memory_space<vmem>>, vector<8x200xf32>,
    return
  }
}

</mosaic_0001>

<llo_original>
// kernel: tpu_custom_call.1
$region0: #{tpu_custom_call.1}
  #allocation0 [shape = 'u32[]', space=smem, size = 0x4, offset = 0x4, fixed_abs, tag = 'smem constant byte address 0x4 - core index']
  #allocation1 [shape = 'u32[144,128]{1,0:T(1,128)}', space=vmem, size = 0x12000, scoped, tag = 'internal scratch']
  %s0 = inlined_call_operand.hbm [shape: f32[8,200], index: 0, kind: input, shape index: {}]
  %s1 = inlined_call_operand.hbm [shape: f32[8,200], index: 1, kind: input, shape index: {}]
  %s2 = inlined_call_operand.vmem [shape: f32[8,4], index: 2, kind: input, shape index: {}]
  %s3 = inlined_call_operand.vmem [shape: f32[8,200], index: 3, kind: input, shape index: {}]
  %s4 = inlined_call_operand.hbm [shape: f32[16,200], index: 4, kind: output, shape index: {}]
  %s5 = sld [smem:[#allocation0]]
  $region34: #{tpu_custom_call.1} parent=0
    _
  %s7 = ssub.s32 1, %s5
  %s8 = scalar_select 0, %s7, %s5
  $region1: #{tpu_custom_call.1} parent=0
    #allocation2 [shape = 'u8[8192]{0}', space=vmem, size = 0x2000, scoped, tag = 'input window, operand 0, single buffered']
    #allocation3 [shape = 's32[1]{0}', space=sflag, size = 0x4, scoped, tag = 'scoped memory for tpu_custom_call.1']
    #allocation4 [shape = 's32[1]{0}', space=sflag, size = 0x4, scoped, tag = 'scoped memory for tpu_custom_call.1']
    #allocation5 [shape = 'u8[8192]{0}', space=vmem, size = 0x2000, scoped, tag = 'input window, operand 1, single buffered']
    #allocation6 [shape = 's32[1]{0}', space=sflag, size = 0x4, scoped, tag = 'scoped memory for tpu_custom_call.1']
    #allocation7 [shape = 'u8[16384]{0}', space=vmem, size = 0x4000, scoped, tag = 'output window, operand 0, single buffered']
    %9 = vsyncpa [#allocation3], 0
    %10 = vsyncpa [#allocation6], 0
    %11 = vsyncpa [#allocation4], 0
    // Predicated region
    $region2: #{tpu_custom_call.1} parent=1 // pred_check
      _
    $region3: #{tpu_custom_call.1} parent=1 // pred_check_branch
      %13 = sbr.rel (0) target = $region5
    $region4: #{tpu_custom_call.1} parent=1 // pred_region
      %s15 = ssub.s32 256, 256
      %16 = vsyncadd [#allocation3], %s15
      %s18 = sshll.u32 [#allocation2], 4
      %s19 = int_to_ptr.vmem [resolvable:$true] %s18
      %21 = dma.hbm_to_vmem [thread:$0]  %s0, 256, %s19, [#allocation3]
    $region5: #{tpu_custom_call.1} parent=1 // pred_fallthru
      _
    // Predicated region
    $region6: #{tpu_custom_call.1} parent=1 // pred_check
      _
    $region7: #{tpu_custom_call.1} parent=1 // pred_check_branch
      %23 = sbr.rel (0) target = $region9
    $region8: #{tpu_custom_call.1} parent=1 // pred_region
      %s25 = ssub.s32 256, 256
      %26 = vsyncadd [#allocation6], %s25
      %s28 = sshll.u32 [#allocation5], 4
      %s29 = int_to_ptr.vmem [resolvable:$true] %s28
      %31 = dma.hbm_to_vmem [thread:$0]  %s1, 256, %s29, [#allocation6]
    $region9: #{tpu_custom_call.1} parent=1 // pred_fallthru
      _
    // Predicated region
    $region10: #{tpu_custom_call.1} parent=1 // pred_check
      _
    $region11: #{tpu_custom_call.1} parent=1 // pred_check_branch
      %33 = sbr.rel (0) target = $region13
    $region12: #{tpu_custom_call.1} parent=1 // pred_region
      _
    $region13: #{tpu_custom_call.1} parent=1 // pred_fallthru
      _
    // Predicated region
    $region14: #{tpu_custom_call.1} parent=1 // pred_check
      _
    $region15: #{tpu_custom_call.1} parent=1 // pred_check_branch
      %35 = sbr.rel (0) target = $region17
    $region16: #{tpu_custom_call.1} parent=1 // pred_region
      _
    $region17: #{tpu_custom_call.1} parent=1 // pred_fallthru
      _
    // Predicated region
    $region18: #{tpu_custom_call.1} parent=1 // pred_check
      _
    $region19: #{tpu_custom_call.1} parent=1 // pred_check_branch
      %37 = sbr.rel (0) target = $region21
    $region20: #{tpu_custom_call.1} parent=1 // pred_region
      %38 = dma.done [#allocation3], 256
    $region21: #{tpu_custom_call.1} parent=1 // pred_fallthru
      _
    // Predicated region
    $region22: #{tpu_custom_call.1} parent=1 // pred_check
      _
    $region23: #{tpu_custom_call.1} parent=1 // pred_check_branch
      %40 = sbr.rel (0) target = $region25
    $region24: #{tpu_custom_call.1} parent=1 // pred_region
      %41 = dma.done [#allocation6], 256
    $region25: #{tpu_custom_call.1} parent=1 // pred_fallthru
      _
    %v42 = vld [vmem:[#allocation2] sm:$0xff]
    %v43 = vld [vmem:[#allocation2 + $0x8] sm:$0xff]
    %v44 = vld [vmem:[#allocation5] sm:$0xff]
    %v45 = vld [vmem:[#allocation5 + $0x8] sm:$0xff]
    %v46 = vmul.f32 %v42, %v44
    %v47 = vmul.f32 %v43, %v45
    %v48 = vld [vmem:[%s2] sm:$0xff]
    %v49 = vld [vmem:[%s3] sm:$0xff]
    %v50 = vld [vmem:[%s3 + $0x8] sm:$0xff]
    %vm51 = vcmask 31744
    %v53 = vsel %vm51, %v48, 0
    %vm55 = vcmask 1043456
    %v57 = vsel %vm55, %v46, 0
    %v60 = vsel %vm55, %v47, 0
    %62 = vmatprep.subr.mxu0 0.0
    %63 = vmatpush1.msra.mxu0 0.0
    %64 = vmatprep.subr.mxu0 0.0
    %65 = vmatpush1.msra.mxu0 0.0
    %66 = vmatprep.subr.mxu0 0.0
    %67 = vmatpush1.msra.mxu0 0.0
    %68 = vmatprep.subr.mxu0 0.0
    %69 = vmatpush1.msra.mxu0 0.0
    %70 = vmatprep.subr.mxu0 0.0
    %71 = vmatpush1.msra.mxu0 0.0
    %72 = vmatprep.subr.mxu0 0.0
    %73 = vmatpush1.msra.mxu0 0.0
    %74 = vmatprep.subr.mxu0 0.0
    %75 = vmatpush1.msra.mxu0 0.0
    %76 = vmatprep.subr.mxu0 0.0
    %77 = vmatpush1.msra.mxu0 0.0
    %78 = vmatprep.subr.mxu0 0.0
    %79 = vmatpush1.msra.mxu0 0.0
    %80 = vmatprep.subr.mxu0 0.0
    %81 = vmatpush1.msra.mxu0 0.0
    %82 = vmatprep.subr.mxu0 0.0
    %83 = vmatpush1.msra.mxu0 0.0
    %84 = vmatprep.subr.mxu0 0.0
    %85 = vmatpush1.msra.mxu0 0.0
    %86 = vmatprep.subr.mxu0 0.0
    %87 = vmatpush1.msra.mxu0 0.0
    %88 = vmatprep.subr.mxu0 0.0
    %89 = vmatpush1.msra.mxu0 0.0
    %90 = vmatprep.subr.mxu0 0.0
    %91 = vmatpush1.msra.mxu0 0.0
    %92 = vmatprep.subr.mxu0 %v60
    %93 = vmatpush1.msra.mxu0 %v57
    %94 = vmatprep.subr.mxu0 0.0
    %95 = vmatpush2.msra.mxu0 0.0
    %96 = vmatprep.subr.mxu0 0.0
    %97 = vmatpush2.msra.mxu0 0.0
    %98 = vmatprep.subr.mxu0 0.0
    %99 = vmatpush2.msra.mxu0 0.0
    %100 = vmatprep.subr.mxu0 0.0
    %101 = vmatpush2.msra.mxu0 0.0
    %102 = vmatprep.subr.mxu0 0.0
    %103 = vmatpush2.msra.mxu0 0.0
    %104 = vmatprep.subr.mxu0 0.0
    %105 = vmatpush2.msra.mxu0 0.0
    %106 = vmatprep.subr.mxu0 0.0
    %107 = vmatpush2.msra.mxu0 0.0
    %108 = vmatprep.subr.mxu0 0.0
    %109 = vmatpush2.msra.mxu0 0.0
    %110 = vmatprep.subr.mxu0 0.0
    %111 = vmatpush2.msra.mxu0 0.0
    %112 = vmatprep.subr.mxu0 0.0
    %113 = vmatpush2.msra.mxu0 0.0
    %114 = vmatprep.subr.mxu0 0.0
    %115 = vmatpush2.msra.mxu0 0.0
    %116 = vmatprep.subr.mxu0 0.0
    %117 = vmatpush2.msra.mxu0 0.0
    %118 = vmatprep.subr.mxu0 0.0
    %119 = vmatpush2.msra.mxu0 0.0
    %120 = vmatprep.subr.mxu0 0.0
    %121 = vmatpush2.msra.mxu0 0.0
    %122 = vmatprep.subr.mxu0 0.0
    %123 = vmatpush2.msra.mxu0 0.0
    %124 = vmatprep.subr.mxu0 0.0
    %125 = vmatpush2.msra.mxu0 0.0
    %126 = vmatprep.mubr.f32.mxu0 0.0
    %127 = vmatmul.mubr.f32.gmra.mxu0 %v53
    %v128 = vpop.f32.mrf.mxu0
    %v129 = vadd.f32 %v49, %v128
    %v130 = vpop.f32.mrf.mxu0
    %v131 = vadd.f32 %v50, %v130
    %132 = vdwg.mxu0
    %v133 = vmax.f32 %v129, 0.0
    %v134 = vmax.f32 %v131, 0.0
    %135 = vst [vmem:[#allocation7] sm:$0xff] %v133
    %vm136 = vcmask 588800
    %137 = vst.msk [vmem:[#allocation7 + $0x8] sm:$0xff] %vm136, %v134
    %v138 = vrot.slane %v46, 4
    %v139 = vrot.slane %v47, 4
    %v140 = vsel %vm55, %v138, 0
    %v142 = vsel %vm55, %v139, 0
    %144 = vmatprep.subr.mxu0 0.0
    %145 = vmatpush1.msra.mxu0 0.0
    %146 = vmatprep.subr.mxu0 0.0
    %147 = vmatpush1.msra.mxu0 0.0
    %148 = vmatprep.subr.mxu0 0.0
    %149 = vmatpush1.msra.mxu0 0.0
    %150 = vmatprep.subr.mxu0 0.0
    %151 = vmatpush1.msra.mxu0 0.0
    %152 = vmatprep.subr.mxu0 0.0
    %153 = vmatpush1.msra.mxu0 0.0
    %154 = vmatprep.subr.mxu0 0.0
    %155 = vmatpush1.msra.mxu0 0.0
    %156 = vmatprep.subr.mxu0 0.0
    %157 = vmatpush1.msra.mxu0 0.0
    %158 = vmatprep.subr.mxu0 0.0
    %159 = vmatpush1.msra.mxu0 0.0
    %160 = vmatprep.subr.mxu0 0.0
    %161 = vmatpush1.msra.mxu0 0.0
    %162 = vmatprep.subr.mxu0 0.0
    %163 = vmatpush1.msra.mxu0 0.0
    %164 = vmatprep.subr.mxu0 0.0
    %165 = vmatpush1.msra.mxu0 0.0
    %166 = vmatprep.subr.mxu0 0.0
    %167 = vmatpush1.msra.mxu0 0.0
    %168 = vmatprep.subr.mxu0 0.0
    %169 = vmatpush1.msra.mxu0 0.0
    %170 = vmatprep.subr.mxu0 0.0
    %171 = vmatpush1.msra.mxu0 0.0
    %172 = vmatprep.subr.mxu0 0.0
    %173 = vmatpush1.msra.mxu0 0.0
    %174 = vmatprep.subr.mxu0 %v142
    %175 = vmatpush1.msra.mxu0 %v140
    %176 = vmatprep.subr.mxu0 0.0
    %177 = vmatpush2.msra.mxu0 0.0
    %178 = vmatprep.subr.mxu0 0.0
    %179 = vmatpush2.msra.mxu0 0.0
    %180 = vmatprep.subr.mxu0 0.0
    %181 = vmatpush2.msra.mxu0 0.0
    %182 = vmatprep.subr.mxu0 0.0
    %183 = vmatpush2.msra.mxu0 0.0
    %184 = vmatprep.subr.mxu0 0.0
    %185 = vmatpush2.msra.mxu0 0.0
    %186 = vmatprep.subr.mxu0 0.0
    %187 = vmatpush2.msra.mxu0 0.0
    %188 = vmatprep.subr.mxu0 0.0
    %189 = vmatpush2.msra.mxu0 0.0
    %190 = vmatprep.subr.mxu0 0.0
    %191 = vmatpush2.msra.mxu0 0.0
    %192 = vmatprep.subr.mxu0 0.0
    %193 = vmatpush2.msra.mxu0 0.0
    %194 = vmatprep.subr.mxu0 0.0
    %195 = vmatpush2.msra.mxu0 0.0
    %196 = vmatprep.subr.mxu0 0.0
    %197 = vmatpush2.msra.mxu0 0.0
    %198 = vmatprep.subr.mxu0 0.0
    %199 = vmatpush2.msra.mxu0 0.0
    %200 = vmatprep.subr.mxu0 0.0
    %201 = vmatpush2.msra.mxu0 0.0
    %202 = vmatprep.subr.mxu0 0.0
    %203 = vmatpush2.msra.mxu0 0.0
    %204 = vmatprep.subr.mxu0 0.0
    %205 = vmatpush2.msra.mxu0 0.0
    %206 = vmatprep.subr.mxu0 0.0
    %207 = vmatpush2.msra.mxu0 0.0
    %208 = vmatprep.mubr.f32.mxu0 0.0
    %209 = vmatmul.mubr.f32.gmra.mxu0 %v53
    %v210 = vpop.f32.mrf.mxu0
    %v211 = vadd.f32 %v49, %v210
    %v212 = vpop.f32.mrf.mxu0
    %v213 = vadd.f32 %v50, %v212
    %214 = vdwg.mxu0
    %v215 = vmax.f32 %v211, 0.0
    %v216 = vmax.f32 %v213, 0.0
    %217 = vst [vmem:[#allocation7 + $0x10] sm:$0xff] %v215
    %218 = vst.msk [vmem:[#allocation7 + $0x18] sm:$0xff] %vm136, %v216
    // Predicated region
    $region26: #{tpu_custom_call.1} parent=1 // pred_check
      _
    $region27: #{tpu_custom_call.1} parent=1 // pred_check_branch
      %220 = sbr.rel (0) target = $region29
    $region28: #{tpu_custom_call.1} parent=1 // pred_region
      %s222 = ssub.s32 512, 512
      %223 = vsyncadd [#allocation4], %s222
      %s224 = sshll.u32 [#allocation7], 4
      %s225 = int_to_ptr.vmem [resolvable:$true] %s224
      %230 = dma.vmem_to_hbm [thread:$0]  %s225, 512, %s4, [#allocation4], 256, 256, 16
    $region29: #{tpu_custom_call.1} parent=1 // pred_fallthru
      _
    // Predicated region
    $region30: #{tpu_custom_call.1} parent=1 // pred_check
      _
    $region31: #{tpu_custom_call.1} parent=1 // pred_check_branch
      %232 = sbr.rel (0) target = $region33
    $region32: #{tpu_custom_call.1} parent=1 // pred_region
      %233 = dma.done [#allocation4], 512
    $region33: #{tpu_custom_call.1} parent=1 // pred_fallthru
      _
    %234 = vsyncpa [#allocation3], 1
    %235 = vsyncpa [#allocation6], 1
    %236 = vsyncpa [#allocation4], 1

</llo_original>
